<compile_context>
chip_gen: v6e
topology: v6e:2x2x1
jax: 0.10.0
libtpu: 0.0.40
codegen_flags: <defaults>
</compile_context>

<pallas_src>
import numpy as np
import jax
import jax.numpy as jnp
from jax.experimental import pallas as pl
from jax.experimental.pallas import tpu as pltpu

NUM_CENTERS = 5
SIGMA = 1.0
LANE = 128  # points per lane-row


def rbf_kernel(c_ref, w_ref, b_ref, x_ref, o_ref):
    # c_ref: (K,) SMEM, w_ref: (K,) SMEM, b_ref: (1,) SMEM
    # x_ref / o_ref: (block_rows, 128) VMEM, N points laid out lane-dense.
    neg_inv_2sig2 = -0.5 / (SIGMA * SIGMA)          # folded at trace time
    x = x_ref[...]                                   # (block_rows, 128) f32
    acc = b_ref[0] + jnp.zeros_like(x)               # start from the bias
    for k in range(NUM_CENTERS):                     # fully unrolled, K = 5
        diff = x - c_ref[k]                          # VPU sub (scalar bcast)
        acc = acc + w_ref[k] * jnp.exp(diff * diff * neg_inv_2sig2)  # EUP exp + VPU FMA
    o_ref[...] = acc                                 # full-width unmasked store


def rbf_net_forward(x, centers, weight, bias, *, block_rows=2048):
    """x: (N, 1); centers: (K, 1); weight: (1, K) (torch Linear layout); bias: (1,)."""
    N = x.shape[0]
    K = centers.shape[0]

    # Small parameters -> flat f32 vectors for the SMEM scalar path.
    c = centers.reshape(K).astype(jnp.float32)       # (K,)
    w = weight.reshape(K).astype(jnp.float32)        # (K,)
    b = bias.reshape(1).astype(jnp.float32)          # (1,)

    # Lane-dense layout: pad N up so it tiles into (rows, 128).
    rows = pl.cdiv(N, LANE)
    # Aim for >= 2 parallel grid steps when there is enough work (v7x: 2 TCs),
    # keep the sublane dim a multiple of 8, cap block size for VMEM safety.
    block_rows = min(block_rows, max(8, pl.cdiv(rows, 2)))
    block_rows = pl.cdiv(block_rows, 8) * 8
    grid_m = pl.cdiv(rows, block_rows)
    padded_rows = grid_m * block_rows
    n_pad = padded_rows * LANE

    x_flat = x.reshape(-1).astype(jnp.float32)
    x_flat = jnp.pad(x_flat, (0, n_pad - N))
    x2d = x_flat.reshape(padded_rows, LANE)

    out2d = pl.pallas_call(
        rbf_kernel,
        out_shape=jax.ShapeDtypeStruct((padded_rows, LANE), jnp.float32),
        grid_spec=pltpu.PrefetchScalarGridSpec(
            num_scalar_prefetch=0,
            grid=(grid_m,),
            in_specs=[
                pl.BlockSpec(memory_space=pltpu.MemorySpace.SMEM),  # centers (K,)
                pl.BlockSpec(memory_space=pltpu.MemorySpace.SMEM),  # weight  (K,)
                pl.BlockSpec(memory_space=pltpu.MemorySpace.SMEM),  # bias    (1,)
                pl.BlockSpec((block_rows, LANE), lambda i: (i, 0)),  # x tile
            ],
            out_specs=pl.BlockSpec((block_rows, LANE), lambda i: (i, 0)),
        ),
        compiler_params=pltpu.CompilerParams(
            dimension_semantics=("parallel",)),
    )(c, w, b, x2d)

    # Back to the module's (N, 1) layout, dropping the padding.
    return out2d.reshape(n_pad, 1)[:N]


def rbf_net_reference(x, centers, weight, bias):
    phi = jnp.exp(-((x - centers.T) ** 2) / (2.0 * SIGMA * SIGMA))
    return phi @ weight.T + bias


if __name__ == "__main__":
    key = jax.random.PRNGKey(0)
    _, k_c, k_w, k_b = jax.random.split(key, 4)

    # Original workload: 1000 linspace points (not a multiple of 128 ->
    # exercises the padding path).
    N = 1000
    x = jnp.linspace(0.0, 2.0 * np.pi, N, dtype=jnp.float32).reshape(-1, 1)

    # Deterministic parameter init mirroring the module's __init__ shapes:
    #   centers = rand(num_centers, 1) * 2*pi
    #   linear  = nn.Linear(num_centers, 1)  (weight (1,K), bias (1,))
    centers = jax.random.uniform(k_c, (NUM_CENTERS, 1), jnp.float32) * 2.0 * np.pi
    bound = 1.0 / np.sqrt(NUM_CENTERS)
    weight = jax.random.uniform(k_w, (1, NUM_CENTERS), jnp.float32,
                                minval=-bound, maxval=bound)
    bias = jax.random.uniform(k_b, (1,), jnp.float32, minval=-bound, maxval=bound)

    out = rbf_net_forward(x, centers, weight, bias)
    out = jax.block_until_ready(out)

    ref = rbf_net_reference(x, centers, weight, bias)
    np.testing.assert_allclose(np.asarray(out), np.asarray(ref),
                               rtol=1e-5, atol=1e-5)
    assert out.shape == (N, 1) and out.dtype == jnp.float32

    print("KERNEL_OK")
</pallas_src>

<mosaic_0001>
module attributes {stable_mosaic.version = 11 : i64} {
  func.func @rbf_kernel(%arg0: i32, %arg1: memref<5xf32, #tpu.memory_space<smem>>, %arg2: memref<5xf32, #tpu.memory_space<smem>>, %arg3: memref<1xf32, #tpu.memory_space<smem>>, %arg4: memref<8x128xf32, #tpu.memory_space<vmem>>, %arg5: memref<8x128xf32, #tpu.memory_space<vmem>>) attributes {dimension_semantics = [#tpu.dimension_semantics<parallel>], iteration_bounds = array<i64: 1>, scalar_prefetch = 0 : i64, scratch_operands = 0 : i64, tpu.core_type = #tpu.core_type<tc>, window_params = [{transform_indices = @transform_0, window_bounds = array<i64: 5>}, {transform_indices = @transform_1, window_bounds = array<i64: 5>}, {transform_indices = @transform_2, window_bounds = array<i64: 1>}, {transform_indices = @transform_3, window_bounds = array<i64: 8, 128>}, {transform_indices = @transform_4, window_bounds = array<i64: 8, 128>}]} {
    %c0 = arith.constant 0 : index
    %c0_0 = arith.constant 0 : index
    %0 = vector.load %arg4[%c0, %c0_0] : memref<8x128xf32, #tpu.memory_space<vmem>>, vector<8x128xf32>
    %c0_1 = arith.constant 0 : index
    %1 = memref.load %arg3[%c0_1] : memref<1xf32, #tpu.memory_space<smem>>
    %cst = arith.constant 0.000000e+00 : f32
    %2 = vector.broadcast %cst : f32 to vector<8x128xf32>
    %3 = vector.broadcast %1 : f32 to vector<8x128xf32>
    %4 = arith.addf %3, %2 : vector<8x128xf32>
    %c0_2 = arith.constant 0 : index
    %5 = memref.load %arg1[%c0_2] : memref<5xf32, #tpu.memory_space<smem>>
    %6 = vector.broadcast %5 : f32 to vector<8x128xf32>
    %7 = arith.subf %0, %6 : vector<8x128xf32>
    %c0_3 = arith.constant 0 : index
    %8 = memref.load %arg2[%c0_3] : memref<5xf32, #tpu.memory_space<smem>>
    %9 = arith.mulf %7, %7 : vector<8x128xf32>
    %cst_4 = arith.constant -5.000000e-01 : f32
    %10 = vector.broadcast %cst_4 : f32 to vector<8x128xf32>
    %11 = arith.mulf %9, %10 : vector<8x128xf32>
    %12 = math.exp %11 : vector<8x128xf32>
    %13 = vector.broadcast %8 : f32 to vector<8x128xf32>
    %14 = arith.mulf %13, %12 : vector<8x128xf32>
    %15 = arith.addf %4, %14 : vector<8x128xf32>
    %c1 = arith.constant 1 : index
    %16 = memref.load %arg1[%c1] : memref<5xf32, #tpu.memory_space<smem>>
    %17 = vector.broadcast %16 : f32 to vector<8x128xf32>
    %18 = arith.subf %0, %17 : vector<8x128xf32>
    %c1_5 = arith.constant 1 : index
    %19 = memref.load %arg2[%c1_5] : memref<5xf32, #tpu.memory_space<smem>>
    %20 = arith.mulf %18, %18 : vector<8x128xf32>
    %cst_6 = arith.constant -5.000000e-01 : f32
    %21 = vector.broadcast %cst_6 : f32 to vector<8x128xf32>
    %22 = arith.mulf %20, %21 : vector<8x128xf32>
    %23 = math.exp %22 : vector<8x128xf32>
    %24 = vector.broadcast %19 : f32 to vector<8x128xf32>
    %25 = arith.mulf %24, %23 : vector<8x128xf32>
    %26 = arith.addf %15, %25 : vector<8x128xf32>
    %c2 = arith.constant 2 : index
    %27 = memref.load %arg1[%c2] : memref<5xf32, #tpu.memory_space<smem>>
    %28 = vector.broadcast %27 : f32 to vector<8x128xf32>
    %29 = arith.subf %0, %28 : vector<8x128xf32>
    %c2_7 = arith.constant 2 : index
    %30 = memref.load %arg2[%c2_7] : memref<5xf32, #tpu.memory_space<smem>>
    %31 = arith.mulf %29, %29 : vector<8x128xf32>
    %cst_8 = arith.constant -5.000000e-01 : f32
    %32 = vector.broadcast %cst_8 : f32 to vector<8x128xf32>
    %33 = arith.mulf %31, %32 : vector<8x128xf32>
    %34 = math.exp %33 : vector<8x128xf32>
    %35 = vector.broadcast %30 : f32 to vector<8x128xf32>
    %36 = arith.mulf %35, %34 : vector<8x128xf32>
    %37 = arith.addf %26, %36 : vector<8x128xf32>
    %c3 = arith.constant 3 : index
    %38 = memref.load %arg1[%c3] : memref<5xf32, #tpu.memory_space<smem>>
    %39 = vector.broadcast %38 : f32 to vector<8x128xf32>
    %40 = arith.subf %0, %39 : vector<8x128xf32>
    %c3_9 = arith.constant 3 : index
    %41 = memref.load %arg2[%c3_9] : memref<5xf32, #tpu.memory_space<smem>>
    %42 = arith.mulf %40, %40 : vector<8x128xf32>
    %cst_10 = arith.constant -5.000000e-01 : f32
    %43 = vector.broadcast %cst_10 : f32 to vector<8x128xf32>
    %44 = arith.mulf %42, %43 : vector<8x128xf32>
    %45 = math.exp %44 : vector<8x128xf32>
    %46 = vector.broadcast %41 : f32 to vector<8x128xf32>
    %47 = arith.mulf %46, %45 : vector<8x128xf32>
    %48 = arith.addf %37, %47 : vector<8x128xf32>
    %c4 = arith.constant 4 : index
    %49 = memref.load %arg1[%c4] : memref<5xf32, #tpu.memory_space<smem>>
    %50 = vector.broadcast %49 : f32 to vector<8x128xf32>
    %51 = arith.subf %0, %50 : vector<8x128xf32>
    %c4_11 = arith.constant 4 : index
    %52 = memref.load %arg2[%c4_11] : memref<5xf32, #tpu.memory_space<smem>>
    %53 = arith.mulf %51, %51 : vector<8x128xf32>
    %cst_12 = arith.constant -5.000000e-01 : f32
    %54 = vector.broadcast %cst_12 : f32 to vector<8x128xf32>
    %55 = arith.mulf %53, %54 : vector<8x128xf32>
    %56 = math.exp %55 : vector<8x128xf32>
    %57 = vector.broadcast %52 : f32 to vector<8x128xf32>
    %58 = arith.mulf %57, %56 : vector<8x128xf32>
    %59 = arith.addf %48, %58 : vector<8x128xf32>
    %c0_13 = arith.constant 0 : index
    %c0_14 = arith.constant 0 : index
    %60 = vector.load %arg5[%c0_13, %c0_14] : memref<8x128xf32, #tpu.memory_space<vmem>>, vector<8x128xf32>
    tpu.vector_store %arg5[%c0_13, %c0_14], %59 {strides = array<i32>} : memref<8x128xf32, #tpu.memory_space<vmem>>, vector<8x128xf32>,
    return
  }
  func.func @transform_0(%arg0: i32) -> i32 {
    %c0_i32 = arith.constant 0 : i32
    %c0_i32_0 = arith.constant 0 : i32
    return %c0_i32 : i32
  }
  func.func @transform_1(%arg0: i32) -> i32 {
    %c0_i32 = arith.constant 0 : i32
    %c0_i32_0 = arith.constant 0 : i32
    return %c0_i32 : i32
  }
  func.func @transform_2(%arg0: i32) -> i32 {
    %c0_i32 = arith.constant 0 : i32
    %c0_i32_0 = arith.constant 0 : i32
    return %c0_i32 : i32
  }
  func.func @transform_3(%arg0: i32) -> (i32, i32) {
    %c0_i32 = arith.constant 0 : i32
    %c0_i32_0 = arith.constant 0 : i32
    return %arg0, %c0_i32 : i32, i32
  }
  func.func @transform_4(%arg0: i32) -> (i32, i32) {
    %c0_i32 = arith.constant 0 : i32
    %c0_i32_0 = arith.constant 0 : i32
    return %arg0, %c0_i32 : i32, i32
  }
}

</mosaic_0001>

<llo_original>
// kernel: tpu_custom_call.1
$region0: #{tpu_custom_call.1}
  #allocation0 [shape = 'u32[]', space=smem, size = 0x4, offset = 0x4, fixed_abs, tag = 'smem constant byte address 0x4 - core index']
  #allocation1 [shape = 'u32[144,128]{1,0:T(1,128)}', space=vmem, size = 0x12000, scoped, tag = 'internal scratch']
  #allocation2 [shape = 'f32[1]{0:T(128)S(6)}', space=smem, size = 0x200, scoped, tag = 'scoped memory for tpu_custom_call.1']
  %s0 = inlined_call_operand.vmem [shape: f32[5], index: 0, kind: input, shape index: {}]
  %s1 = inlined_call_operand.vmem [shape: f32[5], index: 1, kind: input, shape index: {}]
  %s2 = inlined_call_operand.<no memory space> [shape: f32[1], index: 2, kind: input, shape index: {}]
  %s3 = inlined_call_operand.hbm [shape: f32[8,128], index: 3, kind: input, shape index: {}]
  %s4 = inlined_call_operand.hbm [shape: f32[8,128], index: 4, kind: output, shape index: {}]
  %s5 = sld [smem:[#allocation0]]
  $region38: #{tpu_custom_call.1} parent=0
    _
  %s7 = ssub.s32 1, %s5
  %s8 = scalar_select 0, %s7, %s5
  %9 = sst [smem:[#allocation2]] %s2
  $region1: #{tpu_custom_call.1} parent=0
    #allocation3 [shape = 'u8[512]{0}', space=smem, size = 0x200, scoped, tag = 'input window, operand 0, single buffered']
    #allocation4 [shape = 's32[1]{0}', space=sflag, size = 0x4, scoped, tag = 'scoped memory for tpu_custom_call.1']
    #allocation5 [shape = 's32[1]{0}', space=sflag, size = 0x4, scoped, tag = 'scoped memory for tpu_custom_call.1']
    #allocation6 [shape = 's32[1]{0}', space=sflag, size = 0x4, scoped, tag = 'scoped memory for tpu_custom_call.1']
    #allocation7 [shape = 'u8[512]{0}', space=smem, size = 0x200, scoped, tag = 'input window, operand 1, single buffered']
    #allocation8 [shape = 's32[1]{0}', space=sflag, size = 0x4, scoped, tag = 'scoped memory for tpu_custom_call.1']
    #allocation9 [shape = 'u8[4096]{0}', space=vmem, size = 0x1000, scoped, tag = 'input window, operand 3, single buffered']
    #allocation10 [shape = 'u8[4096]{0}', space=vmem, size = 0x1000, scoped, tag = 'output window, operand 0, single buffered']
    %10 = vsyncpa [#allocation6], 0
    %11 = vsyncpa [#allocation8], 0
    %12 = vsyncpa [#allocation4], 0
    %13 = vsyncpa [#allocation5], 0
    // Predicated region
    $region2: #{tpu_custom_call.1} parent=1 // pred_check
      _
    $region3: #{tpu_custom_call.1} parent=1 // pred_check_branch
      %15 = sbr.rel (0) target = $region5
    $region4: #{tpu_custom_call.1} parent=1 // pred_region
      %s17 = ssub.s32 16, 16
      %18 = vsyncadd [#allocation6], %s17
      %s20 = sshll.u32 %s0, 4
      %s21 = int_to_ptr.vmem [resolvable:$true] %s20
      %23 = dma.vmem_to_smem %s21, 16, [#allocation3], [#allocation6]
    $region5: #{tpu_custom_call.1} parent=1 // pred_fallthru
      _
    // Predicated region
    $region6: #{tpu_custom_call.1} parent=1 // pred_check
      _
    $region7: #{tpu_custom_call.1} parent=1 // pred_check_branch
      %25 = sbr.rel (0) target = $region9
    $region8: #{tpu_custom_call.1} parent=1 // pred_region
      %s27 = ssub.s32 16, 16
      %28 = vsyncadd [#allocation8], %s27
      %s30 = sshll.u32 %s1, 4
      %s31 = int_to_ptr.vmem [resolvable:$true] %s30
      %33 = dma.vmem_to_smem %s31, 16, [#allocation7], [#allocation8]
    $region9: #{tpu_custom_call.1} parent=1 // pred_fallthru
      _
    // Predicated region
    $region10: #{tpu_custom_call.1} parent=1 // pred_check
      _
    $region11: #{tpu_custom_call.1} parent=1 // pred_check_branch
      %35 = sbr.rel (0) target = $region13
    $region12: #{tpu_custom_call.1} parent=1 // pred_region
      _
    $region13: #{tpu_custom_call.1} parent=1 // pred_fallthru
      _
    // Predicated region
    $region14: #{tpu_custom_call.1} parent=1 // pred_check
      _
    $region15: #{tpu_custom_call.1} parent=1 // pred_check_branch
      %37 = sbr.rel (0) target = $region17
    $region16: #{tpu_custom_call.1} parent=1 // pred_region
      %s39 = ssub.s32 128, 128
      %40 = vsyncadd [#allocation4], %s39
      %s42 = sshll.u32 [#allocation9], 4
      %s43 = int_to_ptr.vmem [resolvable:$true] %s42
      %45 = dma.hbm_to_vmem [thread:$0]  %s3, 128, %s43, [#allocation4]
    $region17: #{tpu_custom_call.1} parent=1 // pred_fallthru
      _
    // Predicated region
    $region18: #{tpu_custom_call.1} parent=1 // pred_check
      _
    $region19: #{tpu_custom_call.1} parent=1 // pred_check_branch
      %47 = sbr.rel (0) target = $region21
    $region20: #{tpu_custom_call.1} parent=1 // pred_region
      %48 = dma.done [#allocation6], 16
    $region21: #{tpu_custom_call.1} parent=1 // pred_fallthru
      _
    // Predicated region
    $region22: #{tpu_custom_call.1} parent=1 // pred_check
      _
    $region23: #{tpu_custom_call.1} parent=1 // pred_check_branch
      %50 = sbr.rel (0) target = $region25
    $region24: #{tpu_custom_call.1} parent=1 // pred_region
      %51 = dma.done [#allocation8], 16
    $region25: #{tpu_custom_call.1} parent=1 // pred_fallthru
      _
    // Predicated region
    $region26: #{tpu_custom_call.1} parent=1 // pred_check
      _
    $region27: #{tpu_custom_call.1} parent=1 // pred_check_branch
      %53 = sbr.rel (0) target = $region29
    $region28: #{tpu_custom_call.1} parent=1 // pred_region
      %54 = dma.done [#allocation4], 128
    $region29: #{tpu_custom_call.1} parent=1 // pred_fallthru
      _
    %55 = sfence
    %v56 = vld [vmem:[#allocation9] sm:$0xff]
    %s57 = sld [smem:[#allocation2]]
    %v58 = vstv %s57
    %v59 = vadd.f32 %v58, 0.0
    %s60 = sld [smem:[#allocation3]]
    %v61 = vstv %s60
    %v62 = vsub.f32 %v56, %v61
    %s63 = sld [smem:[#allocation7]]
    %v64 = vmul.f32 %v62, %v62
    %v65 = vmul.f32 %v64, -0.5
    %v66 = vmul.f32 %v65, 1.442695
    %v67 = vpow.pop %v66
    %v68 = vstv %s63
    %v69 = vmul.f32 %v68, %v67
    %v70 = vadd.f32 %v59, %v69
    %s71 = sld [smem:[#allocation3 + $0x1]]
    %v72 = vstv %s71
    %v73 = vsub.f32 %v56, %v72
    %s74 = sld [smem:[#allocation7 + $0x1]]
    %v75 = vmul.f32 %v73, %v73
    %v76 = vmul.f32 %v75, -0.5
    %v77 = vmul.f32 %v76, 1.442695
    %v78 = vpow.pop %v77
    %v79 = vstv %s74
    %v80 = vmul.f32 %v79, %v78
    %v81 = vadd.f32 %v70, %v80
    %s82 = sld [smem:[#allocation3 + $0x2]]
    %v83 = vstv %s82
    %v84 = vsub.f32 %v56, %v83
    %s85 = sld [smem:[#allocation7 + $0x2]]
    %v86 = vmul.f32 %v84, %v84
    %v87 = vmul.f32 %v86, -0.5
    %v88 = vmul.f32 %v87, 1.442695
    %v89 = vpow.pop %v88
    %v90 = vstv %s85
    %v91 = vmul.f32 %v90, %v89
    %v92 = vadd.f32 %v81, %v91
    %s93 = sld [smem:[#allocation3 + $0x3]]
    %v94 = vstv %s93
    %v95 = vsub.f32 %v56, %v94
    %s96 = sld [smem:[#allocation7 + $0x3]]
    %v97 = vmul.f32 %v95, %v95
    %v98 = vmul.f32 %v97, -0.5
    %v99 = vmul.f32 %v98, 1.442695
    %v100 = vpow.pop %v99
    %v101 = vstv %s96
    %v102 = vmul.f32 %v101, %v100
    %v103 = vadd.f32 %v92, %v102
    %s104 = sld [smem:[#allocation3 + $0x4]]
    %v105 = vstv %s104
    %v106 = vsub.f32 %v56, %v105
    %s107 = sld [smem:[#allocation7 + $0x4]]
    %v108 = vmul.f32 %v106, %v106
    %v109 = vmul.f32 %v108, -0.5
    %v110 = vmul.f32 %v109, 1.442695
    %v111 = vpow.pop %v110
    %v112 = vstv %s107
    %v113 = vmul.f32 %v112, %v111
    %v114 = vadd.f32 %v103, %v113
    %115 = vst [vmem:[#allocation10] sm:$0xff] %v114
    // Predicated region
    $region30: #{tpu_custom_call.1} parent=1 // pred_check
      _
    $region31: #{tpu_custom_call.1} parent=1 // pred_check_branch
      %117 = sbr.rel (0) target = $region33
    $region32: #{tpu_custom_call.1} parent=1 // pred_region
      %s119 = ssub.s32 128, 128
      %120 = vsyncadd [#allocation5], %s119
      %s122 = sshll.u32 [#allocation10], 4
      %s123 = int_to_ptr.vmem [resolvable:$true] %s122
      %125 = dma.vmem_to_hbm [thread:$0]  %s123, 128, %s4, [#allocation5]
    $region33: #{tpu_custom_call.1} parent=1 // pred_fallthru
      _
    // Predicated region
    $region34: #{tpu_custom_call.1} parent=1 // pred_check
      _
    $region35: #{tpu_custom_call.1} parent=1 // pred_check_branch
      %127 = sbr.rel (0) target = $region37
    $region36: #{tpu_custom_call.1} parent=1 // pred_region
      %128 = dma.done [#allocation5], 128
    $region37: #{tpu_custom_call.1} parent=1 // pred_fallthru
      _
    %129 = vsyncpa [#allocation4], 1
    %130 = vsyncpa [#allocation5], 1
    %131 = vsyncpa [#allocation6], 1
    %132 = vsyncpa [#allocation8], 1

</llo_original>
